<compile_context>
chip_gen: v7x
topology: tpu7x:2x2x1
jax: 0.10.0
libtpu: 0.0.40
codegen_flags: <defaults>
</compile_context>

<pallas_src>
import functools

import jax
import jax.numpy as jnp
import numpy as np
from jax import lax
from jax.experimental import pallas as pl
from jax.experimental.pallas import tpu as pltpu


def _self_attention_kernel(q_ref, kv_ref, mask_ref, out_ref):
    # q_ref:    (1, tq, H)  query-row tile of this batch element
    # kv_ref:   (1, S,  H)  all keys/values (== inputs) of this batch element
    # mask_ref: (1, 1,  S)  1.0 = valid key, 0.0 = masked key
    q = q_ref[0]            # (tq, H)
    kv = kv_ref[0]          # (S,  H)
    m = mask_ref[0]         # (1,  S)

    # scores = q @ kv^T on the MXU, f32 accumulation.      (tq, S)
    scores = lax.dot_general(q, kv, (((1,), (1,)), ((), ())),
                             preferred_element_type=jnp.float32)

    # masked_fill_(~mask, -inf): key mask broadcast over query rows.
    scores = jnp.where(m > 0.5, scores, -jnp.inf)

    # Numerically stable softmax over the key axis.
    smax = jnp.max(scores, axis=-1, keepdims=True)
    e = jnp.exp(scores - smax)
    denom = jnp.sum(e, axis=-1, keepdims=True)
    p = e / denom

    # Weighted sum of values: (tq, S) @ (S, H) on the MXU.
    out = jnp.dot(p, kv, preferred_element_type=jnp.float32)
    out_ref[0] = out.astype(out_ref.dtype)


@functools.partial(jax.jit, static_argnames=("block_q",))
def self_attention_forward(inputs, masks, block_q=256):
    """inputs: (B, S, H) float32, masks: (B, S) bool -> (B, S, H) float32."""
    B, S, H = inputs.shape

    # Query-row tile: large (default 256) when S allows it; otherwise round S
    # up to a sublane multiple so each batch is a single grid step.
    if S >= block_q:
        tq = block_q
    else:
        tq = max(8, -(-S // 8) * 8)
    s_pad = -(-S // tq) * tq            # cdiv padding -> no divisibility assert

    q_in = inputs
    if s_pad != S:
        q_in = jnp.pad(inputs, ((0, 0), (0, s_pad - S), (0, 0)))

    mask_f = masks.astype(jnp.float32).reshape(B, 1, S)

    grid = (B, s_pad // tq)

    # Note: keys/values are kept whole per batch element (fine for moderate S);
    # a very long S would call for a key-tile grid axis with online softmax.
    cost = pl.CostEstimate(
        flops=4 * B * s_pad * S * H,              # QK^T + PV
        transcendentals=B * s_pad * S,            # exp
        bytes_accessed=4 * (q_in.size + grid[1] * inputs.size
                            + mask_f.size + B * s_pad * H),
    )

    out = pl.pallas_call(
        _self_attention_kernel,
        out_shape=jax.ShapeDtypeStruct((B, s_pad, H), jnp.float32),
        grid_spec=pltpu.PrefetchScalarGridSpec(
            num_scalar_prefetch=0,
            grid=grid,
            in_specs=[
                pl.BlockSpec((1, tq, H), lambda b, qi: (b, qi, 0)),  # query tile
                pl.BlockSpec((1, S, H), lambda b, qi: (b, 0, 0)),    # keys/values
                pl.BlockSpec((1, 1, S), lambda b, qi: (b, 0, 0)),    # key mask
            ],
            out_specs=pl.BlockSpec((1, tq, H), lambda b, qi: (b, qi, 0)),
        ),
        compiler_params=pltpu.CompilerParams(
            dimension_semantics=("parallel", "parallel")),
        cost_estimate=cost,
    )(q_in, inputs, mask_f)

    return out[:, :S, :]


def self_attention_reference(inputs, masks):
    """Pure-JAX reference mirroring the PyTorch forward, for verification."""
    scores = jnp.einsum('bqh,bkh->bqk', inputs, inputs)
    scores = jnp.where(masks[:, None, :], scores, -jnp.inf)
    p = jax.nn.softmax(scores, axis=-1)
    return jnp.einsum('bqk,bkh->bqh', p, inputs)


if __name__ == "__main__":
    B, S, H = 2, 8, 32
    key = jax.random.PRNGKey(0)
    k_in, _ = jax.random.split(key)

    inputs = jax.random.normal(k_in, (B, S, H), jnp.float32)
    # Key-padding style mask: batch 0 fully valid, batch 1 has 5 valid keys.
    lengths = jnp.array([S, 5], dtype=jnp.int32)
    masks = jnp.arange(S)[None, :] < lengths[:, None]      # (B, S) bool

    out = self_attention_forward(inputs, masks)
    out = jax.block_until_ready(out)

    ref = self_attention_reference(inputs, masks)
    np.testing.assert_allclose(np.asarray(out), np.asarray(ref),
                               rtol=1e-5, atol=1e-5)
    print("KERNEL_OK")
</pallas_src>

<mosaic_0001>
module attributes {stable_mosaic.version = 11 : i64} {
  func.func @_self_attention_kernel(%arg0: i32, %arg1: i32, %arg2: memref<1x8x32xf32, #tpu.memory_space<vmem>>, %arg3: memref<1x8x32xf32, #tpu.memory_space<vmem>>, %arg4: memref<1x1x8xf32, #tpu.memory_space<vmem>>, %arg5: memref<1x8x32xf32, #tpu.memory_space<vmem>>) attributes {dimension_semantics = [#tpu.dimension_semantics<parallel>, #tpu.dimension_semantics<parallel>], iteration_bounds = array<i64: 2, 1>, scalar_prefetch = 0 : i64, scratch_operands = 0 : i64, tpu.core_type = #tpu.core_type<tc>, window_params = [{transform_indices = @transform_0, window_bounds = array<i64: 1, 8, 32>}, {transform_indices = @transform_1, window_bounds = array<i64: 1, 8, 32>}, {transform_indices = @transform_2, window_bounds = array<i64: 1, 1, 8>}, {transform_indices = @transform_3, window_bounds = array<i64: 1, 8, 32>}]} {
    %c0 = arith.constant 0 : index
    %c0_0 = arith.constant 0 : index
    %c0_1 = arith.constant 0 : index
    %0 = vector.load %arg2[%c0, %c0_0, %c0_1] : memref<1x8x32xf32, #tpu.memory_space<vmem>>, vector<1x8x32xf32>
    %1 = vector.shape_cast %0 : vector<1x8x32xf32> to vector<8x32xf32>
    %c0_2 = arith.constant 0 : index
    %c0_3 = arith.constant 0 : index
    %c0_4 = arith.constant 0 : index
    %2 = vector.load %arg3[%c0_2, %c0_3, %c0_4] : memref<1x8x32xf32, #tpu.memory_space<vmem>>, vector<1x8x32xf32>
    %3 = vector.shape_cast %2 : vector<1x8x32xf32> to vector<8x32xf32>
    %c0_5 = arith.constant 0 : index
    %c0_6 = arith.constant 0 : index
    %c0_7 = arith.constant 0 : index
    %4 = vector.load %arg4[%c0_5, %c0_6, %c0_7] : memref<1x1x8xf32, #tpu.memory_space<vmem>>, vector<1x1x8xf32>
    %5 = vector.shape_cast %4 : vector<1x1x8xf32> to vector<1x8xf32>
    %cst = arith.constant dense<0.000000e+00> : vector<8x8xf32>
    %6 = tpu.matmul %1, %3, %cst {dimension_numbers = #tpu.dot_dimension_numbers<[1], [1], [0], [0], [0, 0, 1, 0], [], []>} : vector<8x32xf32>, vector<8x32xf32>, vector<8x8xf32> -> vector<8x8xf32>
    %cst_8 = arith.constant 5.000000e-01 : f32
    %7 = vector.broadcast %cst_8 : f32 to vector<1x8xf32>
    %8 = arith.cmpf ogt, %5, %7 : vector<1x8xf32>
    %cst_9 = arith.constant 0xFF800000 : f32
    %9 = vector.shape_cast %8 : vector<1x8xi1> to vector<1x8xi1>
    %10 = vector.broadcast %9 : vector<1x8xi1> to vector<8x8xi1>
    %11 = vector.broadcast %cst_9 : f32 to vector<8x8xf32>
    %12 = arith.select %10, %6, %11 : vector<8x8xi1>, vector<8x8xf32>
    %cst_10 = arith.constant dense<0xFF800000> : vector<8xf32>
    %13 = vector.multi_reduction <maximumf>, %12, %cst_10 [1] : vector<8x8xf32> to vector<8xf32>
    %14 = vector.shape_cast %13 : vector<8xf32> to vector<8x1xf32>
    %15 = vector.broadcast %14 : vector<8x1xf32> to vector<8x8xf32>
    %16 = arith.subf %12, %15 : vector<8x8xf32>
    %17 = math.exp %16 : vector<8x8xf32>
    %cst_11 = arith.constant dense<0.000000e+00> : vector<8xf32>
    %18 = vector.multi_reduction <add>, %17, %cst_11 [1] : vector<8x8xf32> to vector<8xf32>
    %19 = vector.shape_cast %18 : vector<8xf32> to vector<8x1xf32>
    %20 = vector.broadcast %19 : vector<8x1xf32> to vector<8x8xf32>
    %21 = arith.divf %17, %20 : vector<8x8xf32>
    %cst_12 = arith.constant dense<0.000000e+00> : vector<8x32xf32>
    %22 = tpu.matmul %21, %3, %cst_12 {dimension_numbers = #tpu.dot_dimension_numbers<[1], [0], [0], [1], [0, 0, 1, 1], [], []>} : vector<8x8xf32>, vector<8x32xf32>, vector<8x32xf32> -> vector<8x32xf32>
    %c0_13 = arith.constant 0 : index
    %c0_14 = arith.constant 0 : index
    %c0_15 = arith.constant 0 : index
    %23 = vector.load %arg5[%c0_13, %c0_14, %c0_15] : memref<1x8x32xf32, #tpu.memory_space<vmem>>, vector<1x8x32xf32>
    %24 = vector.shape_cast %23 : vector<1x8x32xf32> to vector<8x32xf32>
    %25 = vector.shape_cast %22 : vector<8x32xf32> to vector<1x8x32xf32>
    tpu.vector_store %arg5[%c0_13, %c0_14, %c0_15], %25 {strides = array<i32>} : memref<1x8x32xf32, #tpu.memory_space<vmem>>, vector<1x8x32xf32>,
    return
  }
  func.func @transform_0(%arg0: i32, %arg1: i32) -> (i32, i32, i32) {
    %c0_i32 = arith.constant 0 : i32
    %c0_i32_0 = arith.constant 0 : i32
    return %arg0, %arg1, %c0_i32 : i32, i32, i32
  }
  func.func @transform_1(%arg0: i32, %arg1: i32) -> (i32, i32, i32) {
    %c0_i32 = arith.constant 0 : i32
    %c0_i32_0 = arith.constant 0 : i32
    %c0_i32_1 = arith.constant 0 : i32
    return %arg0, %c0_i32, %c0_i32_0 : i32, i32, i32
  }
  func.func @transform_2(%arg0: i32, %arg1: i32) -> (i32, i32, i32) {
    %c0_i32 = arith.constant 0 : i32
    %c0_i32_0 = arith.constant 0 : i32
    %c0_i32_1 = arith.constant 0 : i32
    return %arg0, %c0_i32, %c0_i32_0 : i32, i32, i32
  }
  func.func @transform_3(%arg0: i32, %arg1: i32) -> (i32, i32, i32) {
    %c0_i32 = arith.constant 0 : i32
    %c0_i32_0 = arith.constant 0 : i32
    return %arg0, %arg1, %c0_i32 : i32, i32, i32
  }
}

</mosaic_0001>

<llo_original>
// kernel: self_attention_forward.1
$region0: #{self_attention_forward.1}
  #allocation0 [shape = 'u32[]', space=smem, size = 0x4, offset = 0x4, fixed_abs, tag = 'smem constant byte address 0x4 - core index']
  #allocation1 [shape = 'u32[144,128]{1,0:T(1,128)}', space=vmem, size = 0x12000, scoped, tag = 'internal scratch']
  %s0 = inlined_call_operand.hbm [shape: f32[2,8,32], index: 0, kind: input, shape index: {}, may-alias: {0,1}]
  %s1 = inlined_call_operand.hbm [shape: f32[2,8,32], index: 1, kind: input, shape index: {}, may-alias: {0,1}]
  %s2 = inlined_call_operand.vmem [shape: f32[2,1,8], index: 2, kind: input, shape index: {}]
  %s3 = inlined_call_operand.hbm [shape: f32[2,8,32], index: 3, kind: output, shape index: {}]
  %s4 = sld [smem:[#allocation0]]
  $region53: #{self_attention_forward.1} parent=0
    _
  %s6 = ssub.s32 1, %s4
  %s7 = scalar_select 0, %s6, %s4
  $region1: #{self_attention_forward.1} parent=0
    #allocation2 [shape = 'u8[8192]{0}', space=vmem, size = 0x2000, scoped, tag = 'input window, operand 0']
    #allocation3 [shape = 's32[2]{0}', space=sflag, size = 0x8, scoped, tag = 'scoped memory for self_attention_forward.1']
    #allocation4 [shape = 's32[2]{0}', space=sflag, size = 0x8, scoped, tag = 'scoped memory for self_attention_forward.1']
    #allocation5 [shape = 'u8[8192]{0}', space=vmem, size = 0x2000, scoped, tag = 'input window, operand 1']
    #allocation6 [shape = 's32[2]{0}', space=sflag, size = 0x8, scoped, tag = 'scoped memory for self_attention_forward.1']
    #allocation7 [shape = 'u8[8192]{0}', space=vmem, size = 0x2000, scoped, tag = 'output window, operand 0']
    %8 = vsyncpa [#allocation3], 0
    %s9 = scalar_lea.sflag [#allocation3], 1
    %10 = vsyncpa %s9, 0
    %11 = vsyncpa [#allocation6], 0
    %s12 = scalar_lea.sflag [#allocation6], 1
    %13 = vsyncpa %s12, 0
    %14 = vsyncpa [#allocation4], 0
    %s15 = scalar_lea.sflag [#allocation4], 1
    %16 = vsyncpa %s15, 0
    loop: start=0, step=1, limit=4
    $region2: #{self_attention_forward.1} parent=1 // loop_pre_header
      _
    $region3: #{self_attention_forward.1} parent=1 // loop_header
      %s18 = sphi 0, %s22
      %p19 = scmp.ge.s32.totalorder %s18, 4
      %s25 = sphi 0, %s37
      %s26 = sphi 0, %s33
      %s27 = sphi 0, %s25
      %s28 = sphi 0, %s26
      %s29 = sphi 0, %s27
      %s30 = sphi 0, %s28
      %s42 = sphi 0, %s44
      %s45 = sphi 0, %s42
      %s46 = sphi 0, %s45
      %s62 = sphi 0, %s46
      %s68 = sphi 0, %s70
      %s71 = sphi 0, %s68
      %s72 = sphi 0, %s71
      %s88 = sphi 0, %s72
      %s94 = sphi 0, %s96
      %s97 = sphi 0, %s94
      %s98 = sphi 0, %s97
      %s114 = sphi 0, %s98
      %s122 = sphi 0, %s124
      %s125 = sphi 0, %s122
      %s126 = sphi 0, %s125
      %s142 = sphi 0, %s126
    $region4: #{self_attention_forward.1} parent=1 // loop_header_branch
      %21 = sbr.rel (%p19) target = $region8
    $region5: #{self_attention_forward.1} parent=1 // loop_body
      %s23 = ssub.s32 %s18, 1
      %s24 = ssub.s32 %s18, 2
      %s31 = sadd.s32 1, %s26
      %p32 = scmp.ge.s32.totalorder %s31, 1
      %s33 = scalar_select %p32, 0, %s31
      %s34 = sadd.s32 1, %s25
      %s35 = scalar_select %p32, %s34, %s25
      %p36 = scmp.ge.s32.totalorder %s35, 2
      %s37 = scalar_select %p36, 0, %s35
      %s38 = ssub.s32 %s25, %s37
      %s39 = ssub.s32 %s26, %s33
      %s40 = sor.u32 %s38, %s39
      %p41 = scmp.eq.s32.totalorder %s40, 0
      %s43 = sadd.s32 %s42, 1
      %s44 = scalar_select %p41, %s42, %s43
      %p47 = pneg %p41
      %p48 = scmp.eq.s32.totalorder %s18, 1
      %p49 = por %p47, %p48
      %p50 = scmp.ne.s32.totalorder %s42, %s45
      %p51 = scmp.eq.s32.totalorder %s18, 0
      %p52 = por %p50, %p51
      %p53 = scmp.ne.s32.totalorder %s42, %s45
      %p54 = scmp.eq.s32.totalorder %s23, 1
      %p55 = por %p53, %p54
      %p56 = scmp.ne.s32.totalorder %s45, %s46
      %p57 = scmp.eq.s32.totalorder %s23, 0
      %p58 = por %p56, %p57
      %p59 = scmp.ne.s32.totalorder %s45, %s46
      %p60 = scmp.eq.s32.totalorder %s24, 1
      %p61 = por %p59, %p60
      %p63 = scmp.ne.s32.totalorder %s46, %s62
      %p64 = scmp.eq.s32.totalorder %s24, 0
      %p65 = por %p63, %p64
      %s66 = ssub.s32 %s25, %s37
      %p67 = scmp.eq.s32.totalorder %s66, 0
      %s69 = sadd.s32 %s68, 1
      %s70 = scalar_select %p67, %s68, %s69
      %p73 = pneg %p67
      %p74 = scmp.eq.s32.totalorder %s18, 1
      %p75 = por %p73, %p74
      %p76 = scmp.ne.s32.totalorder %s68, %s71
      %p77 = scmp.eq.s32.totalorder %s18, 0
      %p78 = por %p76, %p77
      %p79 = scmp.ne.s32.totalorder %s68, %s71
      %p80 = scmp.eq.s32.totalorder %s23, 1
      %p81 = por %p79, %p80
      %p82 = scmp.ne.s32.totalorder %s71, %s72
      %p83 = scmp.eq.s32.totalorder %s23, 0
      %p84 = por %p82, %p83
      %p85 = scmp.ne.s32.totalorder %s71, %s72
      %p86 = scmp.eq.s32.totalorder %s24, 1
      %p87 = por %p85, %p86
      %p89 = scmp.ne.s32.totalorder %s72, %s88
      %p90 = scmp.eq.s32.totalorder %s24, 0
      %p91 = por %p89, %p90
      %s92 = ssub.s32 %s25, %s37
      %p93 = scmp.eq.s32.totalorder %s92, 0
      %s95 = sadd.s32 %s94, 1
      %s96 = scalar_select %p93, %s94, %s95
      %p99 = pneg %p93
      %p100 = scmp.eq.s32.totalorder %s18, 1
      %p101 = por %p99, %p100
      %p102 = scmp.ne.s32.totalorder %s94, %s97
      %p103 = scmp.eq.s32.totalorder %s18, 0
      %p104 = por %p102, %p103
      %p105 = scmp.ne.s32.totalorder %s94, %s97
      %p106 = scmp.eq.s32.totalorder %s23, 1
      %p107 = por %p105, %p106
      %p108 = scmp.ne.s32.totalorder %s97, %s98
      %p109 = scmp.eq.s32.totalorder %s23, 0
      %p110 = por %p108, %p109
      %p111 = scmp.ne.s32.totalorder %s97, %s98
      %p112 = scmp.eq.s32.totalorder %s24, 1
      %p113 = por %p111, %p112
      %p115 = scmp.ne.s32.totalorder %s98, %s114
      %p116 = scmp.eq.s32.totalorder %s24, 0
      %p117 = por %p115, %p116
      %s118 = ssub.s32 %s25, %s37
      %s119 = ssub.s32 %s26, %s33
      %s120 = sor.u32 %s118, %s119
      %p121 = scmp.eq.s32.totalorder %s120, 0
      %s123 = sadd.s32 %s122, 1
      %s124 = scalar_select %p121, %s122, %s123
      %p127 = pneg %p121
      %p128 = scmp.eq.s32.totalorder %s18, 1
      %p129 = por %p127, %p128
      %p130 = scmp.ne.s32.totalorder %s122, %s125
      %p131 = scmp.eq.s32.totalorder %s18, 0
      %p132 = por %p130, %p131
      %p133 = scmp.ne.s32.totalorder %s122, %s125
      %p134 = scmp.eq.s32.totalorder %s23, 1
      %p135 = por %p133, %p134
      %p136 = scmp.ne.s32.totalorder %s125, %s126
      %p137 = scmp.eq.s32.totalorder %s23, 0
      %p138 = por %p136, %p137
      %p139 = scmp.ne.s32.totalorder %s125, %s126
      %p140 = scmp.eq.s32.totalorder %s24, 1
      %p141 = por %p139, %p140
      %p143 = scmp.ne.s32.totalorder %s126, %s142
      %p144 = scmp.eq.s32.totalorder %s24, 0
      %p145 = por %p143, %p144
      %p146 = scmp.le.s32.totalorder 1, %s18
      %p147 = scmp.lt.s32.totalorder %s18, 3
      %p148 = pnand %p146, %p147
      %p149 = pneg %p148
      // Predicated region
      $region9: #{self_attention_forward.1} parent=5 // pred_check
        _
      $region10: #{self_attention_forward.1} parent=5 // pred_check_branch
        %151 = sbr.rel (%p148) target = $region12
      $region11: #{self_attention_forward.1} parent=5 // pred_region
        %s152 = ssub.s32 %s18, 1
      $region12: #{self_attention_forward.1} parent=5 // pred_fallthru
        _
      %p153 = scmp.lt.s32.totalorder %s18, 2
      // Predicated region
      $region13: #{self_attention_forward.1} parent=5 // pred_check
        %p154 = pneg %p153
      $region14: #{self_attention_forward.1} parent=5 // pred_check_branch
        %156 = sbr.rel (%p154) target = $region16
      $region15: #{self_attention_forward.1} parent=5 // pred_region
        // Predicated region
        $region17: #{self_attention_forward.1} parent=15 // pred_check
          %p157 = pneg %p52
        $region18: #{self_attention_forward.1} parent=15 // pred_check_branch
          %159 = sbr.rel (%p157) target = $region20
        $region19: #{self_attention_forward.1} parent=15 // pred_region
          %s160 = sand.u32 %s42, 1
          %s161 = scalar_lea.sflag [#allocation3], %s160
          %s162 = sand.u32 %s42, 1
          %s163 = smul.addr %s162, 8
          %s164 = scalar_lea.vmem [#allocation2], %s163
          %s166 = ssub.s32 128, 128
          %167 = vsyncadd %s161, %s166
          %s168 = sadd.s32 %s26, %s25
          %s169 = smul.addr %s168, 128
          %s170 = scalar_lea.hbm %s0, %s169
          %s172 = sshll.u32 %s164, 4
          %s173 = int_to_ptr.vmem [resolvable:$true] %s172
          %175 = dma.hbm_to_vmem [thread:$0]  %s170, 128, %s173, %s161
        $region20: #{self_attention_forward.1} parent=15 // pred_fallthru
          _
        // Predicated region
        $region21: #{self_attention_forward.1} parent=15 // pred_check
          %p176 = pneg %p78
        $region22: #{self_attention_forward.1} parent=15 // pred_check_branch
          %178 = sbr.rel (%p176) target = $region24
        $region23: #{self_attention_forward.1} parent=15 // pred_region
          %s179 = sand.u32 %s68, 1
          %s180 = scalar_lea.sflag [#allocation6], %s179
          %s181 = sand.u32 %s68, 1
          %s182 = smul.addr %s181, 8
          %s183 = scalar_lea.vmem [#allocation5], %s182
          %s185 = ssub.s32 128, 128
          %186 = vsyncadd %s180, %s185
          %s187 = smul.addr %s25, 128
          %s188 = scalar_lea.hbm %s1, %s187
          %s190 = sshll.u32 %s183, 4
          %s191 = int_to_ptr.vmem [resolvable:$true] %s190
          %193 = dma.hbm_to_vmem [thread:$0]  %s188, 128, %s191, %s180
        $region24: #{self_attention_forward.1} parent=15 // pred_fallthru
          _
        // Predicated region
        $region25: #{self_attention_forward.1} parent=15 // pred_check
          %p194 = pneg %p104
        $region26: #{self_attention_forward.1} parent=15 // pred_check_branch
          %196 = sbr.rel (%p194) target = $region28
        $region27: #{self_attention_forward.1} parent=15 // pred_region
          %p197 = scmp.lt.s32.totalorder %s25, 1
          %s198 = scalar_select %p197, %s25, 1
          %s199 = scalar_lea.vmem %s2, %s198
        $region28: #{self_attention_forward.1} parent=15 // pred_fallthru
          _
      $region16: #{self_attention_forward.1} parent=5 // pred_fallthru
        _
      %p200 = scmp.le.s32.totalorder 1, %s18
      %p201 = scmp.lt.s32.totalorder %s18, 3
      %p202 = pnand %p200, %p201
      %p203 = pneg %p202
      // Predicated region
      $region29: #{self_attention_forward.1} parent=5 // pred_check
        _
      $region30: #{self_attention_forward.1} parent=5 // pred_check_branch
        %205 = sbr.rel (%p202) target = $region32
      $region31: #{self_attention_forward.1} parent=5 // pred_region
        %s206 = ssub.s32 %s18, 1
        %s207 = sand.u32 %s45, 1
        %s208 = scalar_lea.sflag [#allocation3], %s207
        %s209 = sand.u32 %s45, 1
        %s210 = smul.addr %s209, 8
        %s211 = scalar_lea.vmem [#allocation2], %s210
        // Predicated region
        $region33: #{self_attention_forward.1} parent=31 // pred_check
          %p212 = pneg %p58
        $region34: #{self_attention_forward.1} parent=31 // pred_check_branch
          %214 = sbr.rel (%p212) target = $region36
        $region35: #{self_attention_forward.1} parent=31 // pred_region
          %215 = dma.done %s208, 128
        $region36: #{self_attention_forward.1} parent=31 // pred_fallthru
          _
        %s216 = sand.u32 %s71, 1
        %s217 = scalar_lea.sflag [#allocation6], %s216
        %s218 = sand.u32 %s71, 1
        %s219 = smul.addr %s218, 8
        %s220 = scalar_lea.vmem [#allocation5], %s219
        // Predicated region
        $region37: #{self_attention_forward.1} parent=31 // pred_check
          %p221 = pneg %p84
        $region38: #{self_attention_forward.1} parent=31 // pred_check_branch
          %223 = sbr.rel (%p221) target = $region40
        $region39: #{self_attention_forward.1} parent=31 // pred_region
          %224 = dma.done %s217, 128
        $region40: #{self_attention_forward.1} parent=31 // pred_fallthru
          _
        %s225 = sand.u32 %s45, 1
        %s226 = scalar_lea.sflag [#allocation3], %s225
        %s227 = sand.u32 %s45, 1
        %s228 = smul.addr %s227, 8
        %s229 = scalar_lea.vmem [#allocation2], %s228
        %p230 = pneg %p58
        %p231 = pneg %p55
        %s232 = sand.u32 %s71, 1
        %s233 = scalar_lea.sflag [#allocation6], %s232
        %s234 = sand.u32 %s71, 1
        %s235 = smul.addr %s234, 8
        %s236 = scalar_lea.vmem [#allocation5], %s235
        %p237 = pneg %p84
        %p238 = pneg %p81
        %p239 = scmp.lt.s32.totalorder %s27, 1
        %s240 = scalar_select %p239, %s27, 1
        %s241 = scalar_lea.vmem %s2, %s240
        %p242 = pneg %p110
        %p243 = pneg %p107
        %p244 = pneg %p138
        %p245 = pneg %p135
        %s246 = sand.u32 %s125, 1
        %s247 = scalar_lea.sflag [#allocation4], %s246
        %s248 = sand.u32 %s125, 1
        %s249 = smul.addr %s248, 8
        %s250 = scalar_lea.vmem [#allocation7], %s249
        %p251 = scmp.lt.s32.totalorder %s27, 1
        %s252 = scalar_select %p251, %s27, 1
        %s253 = scalar_lea.vmem %s2, %s252
        %v254 = vld [vmem:[%s211] sm:$0xff]
        %v255 = vld [vmem:[%s220] sm:$0xff]
        %v256 = vld [vmem:[%s253] sm:$0x1]
        %vm257 = vcmask 261120
        %v259 = vsel %vm257, %v254, 0
        %v262 = vsel %vm257, %v255, 0
        %264 = vmatprep.subr.mxu0 0.0
        %265 = vmatpush1.xpose.msra.mxu0 %v262
        %266 = vmatprep.subr.mxu0 0.0
        %267 = vmatpush1.xpose.msra.mxu0 0.0
        %268 = vmatprep.subr.mxu0 0.0
        %269 = vmatpush1.xpose.msra.mxu0 0.0
        %270 = vmatprep.subr.mxu0 0.0
        %271 = vmatpush1.xpose.msra.mxu0 0.0
        %272 = vmatprep.subr.mxu0 0.0
        %273 = vmatpush1.xpose.msra.mxu0 0.0
        %274 = vmatprep.subr.mxu0 0.0
        %275 = vmatpush1.xpose.msra.mxu0 0.0
        %276 = vmatprep.subr.mxu0 0.0
        %277 = vmatpush1.xpose.msra.mxu0 0.0
        %278 = vmatprep.subr.mxu0 0.0
        %279 = vmatpush1.xpose.msra.mxu0 0.0
        %280 = vmatprep.subr.mxu0 0.0
        %281 = vmatpush1.xpose.msra.mxu0 0.0
        %282 = vmatprep.subr.mxu0 0.0
        %283 = vmatpush1.xpose.msra.mxu0 0.0
        %284 = vmatprep.subr.mxu0 0.0
        %285 = vmatpush1.xpose.msra.mxu0 0.0
        %286 = vmatprep.subr.mxu0 0.0
        %287 = vmatpush1.xpose.msra.mxu0 0.0
        %288 = vmatprep.subr.mxu0 0.0
        %289 = vmatpush1.xpose.msra.mxu0 0.0
        %290 = vmatprep.subr.mxu0 0.0
        %291 = vmatpush1.xpose.msra.mxu0 0.0
        %292 = vmatprep.subr.mxu0 0.0
        %293 = vmatpush1.xpose.msra.mxu0 0.0
        %294 = vmatprep.subr.mxu0 0.0
        %295 = vmatpush1.xpose.msra.mxu0 0.0
        %296 = vmatprep.subr.mxu0 0.0
        %297 = vmatpush1.xpose.msra.mxu0 0.0
        %298 = vmatprep.subr.mxu0 0.0
        %299 = vmatpush1.xpose.msra.mxu0 0.0
        %300 = vmatprep.subr.mxu0 0.0
        %301 = vmatpush1.xpose.msra.mxu0 0.0
        %302 = vmatprep.subr.mxu0 0.0
        %303 = vmatpush1.xpose.msra.mxu0 0.0
        %304 = vmatprep.subr.mxu0 0.0
        %305 = vmatpush1.xpose.msra.mxu0 0.0
        %306 = vmatprep.subr.mxu0 0.0
        %307 = vmatpush1.xpose.msra.mxu0 0.0
        %308 = vmatprep.subr.mxu0 0.0
        %309 = vmatpush1.xpose.msra.mxu0 0.0
        %310 = vmatprep.subr.mxu0 0.0
        %311 = vmatpush1.xpose.msra.mxu0 0.0
        %312 = vmatprep.subr.mxu0 0.0
        %313 = vmatpush1.xpose.msra.mxu0 0.0
        %314 = vmatprep.subr.mxu0 0.0
        %315 = vmatpush1.xpose.msra.mxu0 0.0
        %316 = vmatprep.subr.mxu0 0.0
        %317 = vmatpush1.xpose.msra.mxu0 0.0
        %318 = vmatprep.subr.mxu0 0.0
        %319 = vmatpush1.xpose.msra.mxu0 0.0
        %320 = vmatprep.subr.mxu0 0.0
        %321 = vmatpush1.xpose.msra.mxu0 0.0
        %322 = vmatprep.subr.mxu0 0.0
        %323 = vmatpush1.xpose.msra.mxu0 0.0
        %324 = vmatprep.subr.mxu0 0.0
        %325 = vmatpush1.xpose.msra.mxu0 0.0
        %326 = vmatprep.subr.mxu0 0.0
        %327 = vmatpush1.xpose.msra.mxu0 0.0
        %328 = vmatprep.mubr.f32.mxu0 0.0
        %329 = vmatmul.mubr.f32.gmra.mrb[0].mxu0 %v259
        %v330 = vpop.f32.mrb[0].mxu0
        %v331 = vadd.f32 0.0, %v330
        %v332 = vpop.f32.mrb[0].mxu0
        %333 = vdwg.mxu0
        %vm334 = vcmp.gt.f32.partialorder %v256, 0.5
        %v335 = vsel %vm334, 1, 0
        %v336 = vlaneseq
        %v337 = vshrl.u32 %v336, 7
        %v338 = vsub.s32 0, %v337
        %v339 = vrot.slane %v335, %v338
        %vm340 = vcmp.eq.s32.totalorder %v339, 1
        %v341 = vsel %vm340, %v331, -inf
        %vm342 = vcmask 64512
        %v343 = vsel %vm342, %v341, -inf
        %344 = vmax.xlane.f32.xlu0 %v343
        %v345 = vpop.xlane.xlu0 %344
        %v346 = vsub.f32 %v341, %v345
        %v347 = vmul.f32 %v346, 1.442695
        %v348 = vpow.pop %v347
        %v349 = vsel %vm342, %v348, 0.0
        %350 = vadd.xlane.f32.xlu0 %v349
        %v351 = vpop.xlane.xlu0 %350
        %v352 = vrcp.pop %v351
        %v353 = vmul.f32 %v348, %v352
        %v355 = vsel %vm342, %v353, 0
        %357 = vmatprep.subr.mxu0 0.0
        %358 = vmatpush1.msra.mxu0 %v255
        %359 = vmatprep.subr.mxu0 0.0
        %360 = vmatpush1.msra.mxu0 0.0
        %361 = vmatprep.subr.mxu0 0.0
        %362 = vmatpush1.msra.mxu0 0.0
        %363 = vmatprep.subr.mxu0 0.0
        %364 = vmatpush1.msra.mxu0 0.0
        %365 = vmatprep.subr.mxu0 0.0
        %366 = vmatpush1.msra.mxu0 0.0
        %367 = vmatprep.subr.mxu0 0.0
        %368 = vmatpush1.msra.mxu0 0.0
        %369 = vmatprep.subr.mxu0 0.0
        %370 = vmatpush1.msra.mxu0 0.0
        %371 = vmatprep.subr.mxu0 0.0
        %372 = vmatpush1.msra.mxu0 0.0
        %373 = vmatprep.subr.mxu0 0.0
        %374 = vmatpush1.msra.mxu0 0.0
        %375 = vmatprep.subr.mxu0 0.0
        %376 = vmatpush1.msra.mxu0 0.0
        %377 = vmatprep.subr.mxu0 0.0
        %378 = vmatpush1.msra.mxu0 0.0
        %379 = vmatprep.subr.mxu0 0.0
        %380 = vmatpush1.msra.mxu0 0.0
        %381 = vmatprep.subr.mxu0 0.0
        %382 = vmatpush1.msra.mxu0 0.0
        %383 = vmatprep.subr.mxu0 0.0
        %384 = vmatpush1.msra.mxu0 0.0
        %385 = vmatprep.subr.mxu0 0.0
        %386 = vmatpush1.msra.mxu0 0.0
        %387 = vmatprep.subr.mxu0 0.0
        %388 = vmatpush1.msra.mxu0 0.0
        %389 = vmatprep.subr.mxu0 0.0
        %390 = vmatpush1.msra.mxu0 0.0
        %391 = vmatprep.subr.mxu0 0.0
        %392 = vmatpush1.msra.mxu0 0.0
        %393 = vmatprep.subr.mxu0 0.0
        %394 = vmatpush1.msra.mxu0 0.0
        %395 = vmatprep.subr.mxu0 0.0
        %396 = vmatpush1.msra.mxu0 0.0
        %397 = vmatprep.subr.mxu0 0.0
        %398 = vmatpush1.msra.mxu0 0.0
        %399 = vmatprep.subr.mxu0 0.0
        %400 = vmatpush1.msra.mxu0 0.0
        %401 = vmatprep.subr.mxu0 0.0
        %402 = vmatpush1.msra.mxu0 0.0
        %403 = vmatprep.subr.mxu0 0.0
        %404 = vmatpush1.msra.mxu0 0.0
        %405 = vmatprep.subr.mxu0 0.0
        %406 = vmatpush1.msra.mxu0 0.0
        %407 = vmatprep.subr.mxu0 0.0
        %408 = vmatpush1.msra.mxu0 0.0
        %409 = vmatprep.subr.mxu0 0.0
        %410 = vmatpush1.msra.mxu0 0.0
        %411 = vmatprep.subr.mxu0 0.0
        %412 = vmatpush1.msra.mxu0 0.0
        %413 = vmatprep.subr.mxu0 0.0
        %414 = vmatpush1.msra.mxu0 0.0
        %415 = vmatprep.subr.mxu0 0.0
        %416 = vmatpush1.msra.mxu0 0.0
        %417 = vmatprep.subr.mxu0 0.0
        %418 = vmatpush1.msra.mxu0 0.0
        %419 = vmatprep.subr.mxu0 0.0
        %420 = vmatpush1.msra.mxu0 0.0
        %421 = vmatprep.mubr.f32.mxu0 0.0
        %422 = vmatmul.mubr.f32.gmra.mrb[0].mxu0 %v355
        %v423 = vpop.f32.mrb[0].mxu0
        %v424 = vadd.f32 0.0, %v423
        %v425 = vpop.f32.mrb[0].mxu0
        %426 = vdwg.mxu0
        %427 = vst.msk [vmem:[%s250] sm:$0xff] %vm257, %v424
        %s428 = sand.u32 %s125, 1
        %s429 = scalar_lea.sflag [#allocation4], %s428
        %s430 = sand.u32 %s125, 1
        %s431 = smul.addr %s430, 8
        %s432 = scalar_lea.vmem [#allocation7], %s431
        // Predicated region
        $region41: #{self_attention_forward.1} parent=31 // pred_check
          %p433 = pneg %p135
        $region42: #{self_attention_forward.1} parent=31 // pred_check_branch
          %435 = sbr.rel (%p433) target = $region44
        $region43: #{self_attention_forward.1} parent=31 // pred_region
          %s437 = ssub.s32 128, 128
          %438 = vsyncadd %s429, %s437
          %s439 = sadd.s32 %s28, %s27
          %s440 = smul.addr %s439, 128
          %s441 = scalar_lea.hbm %s3, %s440
          %s443 = sshll.u32 %s432, 4
          %s444 = int_to_ptr.vmem [resolvable:$true] %s443
          %446 = dma.vmem_to_hbm [thread:$0]  %s444, 128, %s441, %s429
        $region44: #{self_attention_forward.1} parent=31 // pred_fallthru
          _
      $region32: #{self_attention_forward.1} parent=5 // pred_fallthru
        _
      %p447 = scmp.le.s32.totalorder 2, %s18
      // Predicated region
      $region45: #{self_attention_forward.1} parent=5 // pred_check
        %p448 = pneg %p447
      $region46: #{self_attention_forward.1} parent=5 // pred_check_branch
        %450 = sbr.rel (%p448) target = $region48
      $region47: #{self_attention_forward.1} parent=5 // pred_region
        %s451 = ssub.s32 %s18, 2
        // Predicated region
        $region49: #{self_attention_forward.1} parent=47 // pred_check
          %p452 = pneg %p141
        $region50: #{self_attention_forward.1} parent=47 // pred_check_branch
          %454 = sbr.rel (%p452) target = $region52
        $region51: #{self_attention_forward.1} parent=47 // pred_region
          %s455 = sand.u32 %s126, 1
          %s456 = scalar_lea.sflag [#allocation4], %s455
          %s457 = sand.u32 %s126, 1
          %s458 = smul.addr %s457, 8
          %s459 = scalar_lea.vmem [#allocation7], %s458
          %460 = dma.done %s456, 128
        $region52: #{self_attention_forward.1} parent=47 // pred_fallthru
          _
      $region48: #{self_attention_forward.1} parent=5 // pred_fallthru
        _
    $region6: #{self_attention_forward.1} parent=1 // loop_footer
      %s22 = sadd.s32 1, %s18
    $region7: #{self_attention_forward.1} parent=1 // loop_footer_branch
      %17 = sbr.rel target = $region3
    $region8: #{self_attention_forward.1} parent=1 // loop_exit
      _
    %461 = vsyncpa [#allocation3], 1
    %s462 = scalar_lea.sflag [#allocation3], 1
    %463 = vsyncpa %s462, 1
    %464 = vsyncpa [#allocation6], 1
    %s465 = scalar_lea.sflag [#allocation6], 1
    %466 = vsyncpa %s465, 1
    %467 = vsyncpa [#allocation4], 1
    %s468 = scalar_lea.sflag [#allocation4], 1
    %469 = vsyncpa %s468, 1

</llo_original>
